<compile_context>
chip_gen: v7x
topology: tpu7x:2x2x1
jax: 0.10.0
libtpu: 0.0.40
codegen_flags: <defaults>
</compile_context>

<pallas_src>
import functools

import jax
import jax.numpy as jnp
from jax.experimental import pallas as pl
from jax.experimental.pallas import tpu as pltpu


def _round_up(x, m):
    return (x + m - 1) // m * m


def _vmem_capacity_bytes():
    try:
        cap = int(pltpu.get_tpu_info().vmem_capacity_bytes)
        if cap > 0:
            return cap
    except Exception:
        pass
    return 64 << 20  # conservative (v7x) fallback; v5e/v6e have 128 MiB


def _vmem_cost(tb, tv, d, out_bytes):
    """Rough VMEM requirement for a (tb, tv) tiling."""
    return (2 * tv * d * 2            # neigh tiles (bf16), double buffered
            + 2 * tb * tv * out_bytes  # streamed output blocks, double buffered
            + 2 * tb * d * 2          # x_emb blocks (bf16), double buffered
            + 2 * tb * tv * 4         # f32 logits / exp intermediates
            + 2 * tb * 128 * 4        # m / l scratch (lane padded)
            + (2 << 20))              # compiler scratch headroom


def _select_tiles(B, V, D, out_bytes, vmem_cap, max_vocab_tile=None):
    budget = max(int(vmem_cap * 0.70), 16 << 20)
    B_pad = _round_up(B, 8)

    # Batch tile: as large as practical (minimizes passes over the neigh
    # table), but keep nb >= 2 when the batch allows it so both v7x
    # TensorCores get work on the "parallel" batch axis.
    tb_cap = B_pad if B_pad < 16 else B_pad // 2
    tb = max(8, (min(tb_cap, 256) // 8) * 8)
    while tb > 8 and B_pad % tb != 0:
        tb -= 8

    # Vocab tile: whole (128-padded) table resident in VMEM when it fits
    # (the table is then DMA'd from HBM exactly once); otherwise the largest
    # 128-aligned tile that fits the budget.
    tv = _round_up(V, 128)
    if max_vocab_tile is not None:
        tv = min(tv, max(128, _round_up(max_vocab_tile, 128)))
    while tv > 128 and _vmem_cost(tb, tv, D, out_bytes) > budget:
        tv = _round_up(tv // 2, 128)
    while tb > 8 and _vmem_cost(tb, tv, D, out_bytes) > budget:
        tb -= 8
        while tb > 8 and B_pad % tb != 0:
            tb -= 8

    V_pad = _round_up(V, tv)
    return B_pad, tb, V_pad, tv


def _make_single_tile_kernel(mask_tail, v_actual):
    """Whole vocab in one tile: direct softmax, neigh block index constant."""

    def kernel(x_ref, neigh_ref, out_ref):
        # bf16 MXU matmul, f32 accumulation.
        # TODO(synk): small D underfills the 256-wide MXU; pad D or batch
        # several vocab tiles per matmul if this ever becomes compute-bound.
        s = jax.lax.dot_general(
            x_ref[...], neigh_ref[...],
            dimension_numbers=(((1,), (1,)), ((), ())),
            preferred_element_type=jnp.float32)          # [tb, V_pad]
        if mask_tail:
            col = jax.lax.broadcasted_iota(jnp.int32, s.shape, 1)
            s = jnp.where(col < v_actual, s, -jnp.inf)
        m = jnp.max(s, axis=-1, keepdims=True)
        p = jnp.exp(s - m)
        inv = 1.0 / jnp.sum(p, axis=-1, keepdims=True)   # exact: rows sum to 1
        out_ref[...] = (p * inv).astype(out_ref.dtype)

    return kernel


def _make_two_pass_kernel(mask_tail, v_actual):
    """Two-pass online softmax over streamed vocab tiles.

    Grid = (nb, 2, nv): phase 0 accumulates running max/sum only; phase 1
    re-streams the neigh tiles and writes normalized probabilities straight
    into streamed (tb, tv) output blocks -- no resident-row rescale.
    """

    def kernel(x_ref, neigh_ref, out_ref, m_sc, l_sc):
        ph = pl.program_id(1)            # 0: stats pass, 1: write pass
        j = pl.program_id(2)             # vocab tile
        nv = pl.num_programs(2)
        tv = neigh_ref.shape[0]

        s = jax.lax.dot_general(
            x_ref[...], neigh_ref[...],
            dimension_numbers=(((1,), (1,)), ((), ())),
            preferred_element_type=jnp.float32)          # [tb, tv]
        if mask_tail:
            col = j * tv + jax.lax.broadcasted_iota(jnp.int32, s.shape, 1)
            s = jnp.where(col < v_actual, s, -jnp.inf)

        @pl.when(jnp.logical_and(ph == 0, j == 0))
        def _():
            m_sc[...] = jnp.full_like(m_sc, -jnp.inf)
            l_sc[...] = jnp.zeros_like(l_sc)

        @pl.when(ph == 0)
        def _():
            m_prev = m_sc[...]
            m_new = jnp.maximum(m_prev, jnp.max(s, axis=-1, keepdims=True))
            l_sc[...] = (jnp.exp(m_prev - m_new) * l_sc[...]
                         + jnp.sum(jnp.exp(s - m_new), axis=-1, keepdims=True))
            m_sc[...] = m_new

        # End of the stats pass: one exact reciprocal per batch tile.
        @pl.when(jnp.logical_and(ph == 0, j == nv - 1))
        def _():
            l_sc[...] = 1.0 / l_sc[...]

        # Write pass: each step fully writes its own streamed output block.
        @pl.when(ph == 1)
        def _():
            out_ref[...] = (jnp.exp(s - m_sc[...]) * l_sc[...]).astype(out_ref.dtype)

    return kernel


def skipgram_forward(x_idx, word_embs, neigh_embs, vocabs=None,
                     out_dtype=jnp.float32, max_vocab_tile=None):
    """y = softmax(word_embs[x] @ neigh_embs.T, axis=1)  -> [B, V].

    `vocabs` is accepted for API parity with the PyTorch module but ignored:
    self.vocabs is arange(V), so the neigh gather is an identity.
    Pass `out_dtype=jnp.bfloat16` to halve the output write traffic (v5e win);
    default is f32 for PyTorch parity.  `max_vocab_tile` is a test/tuning hook.
    """
    del vocabs
    V, D = word_embs.shape
    B = int(x_idx.shape[0])
    out_bytes = jnp.dtype(out_dtype).itemsize

    vmem_cap = _vmem_capacity_bytes()
    B_pad, tb, V_pad, tv = _select_tiles(B, V, D, out_bytes, vmem_cap,
                                         max_vocab_tile=max_vocab_tile)
    nb, nv = B_pad // tb, V_pad // tv
    mask_tail = V_pad != V

    # Query-row gather via XLA (B*D*4 bytes, negligible), cast to bf16 once.
    # Note: XLA clamps out-of-range ids (PyTorch would raise).
    idx = jnp.asarray(x_idx, dtype=jnp.int32)
    x_emb = jnp.take(word_embs, idx, axis=0).astype(jnp.bfloat16)
    if B_pad != B:
        x_emb = jnp.pad(x_emb, ((0, B_pad - B), (0, 0)))

    # Streamed table in bf16. Callers should keep neigh_embs persistently bf16
    # so this cast (a V*D HBM round trip) does not run on every call.
    neigh = (neigh_embs if neigh_embs.dtype == jnp.bfloat16
             else neigh_embs.astype(jnp.bfloat16))
    if V_pad != V:
        neigh = jnp.pad(neigh, ((0, V_pad - V), (0, 0)))

    est = _vmem_cost(tb, tv, D, out_bytes)
    vmem_limit = int(min(max(est * 5 // 4, 32 << 20), int(vmem_cap * 0.78)))

    if nv == 1:
        # Whole table resident in VMEM: constant neigh block index -> single
        # HBM read of the table; direct one-pass softmax per batch tile.
        out = pl.pallas_call(
            _make_single_tile_kernel(mask_tail, V),
            out_shape=jax.ShapeDtypeStruct((B_pad, V_pad), out_dtype),
            grid_spec=pltpu.PrefetchScalarGridSpec(
                num_scalar_prefetch=0,
                grid=(nb,),
                in_specs=[
                    pl.BlockSpec((tb, D), lambda i: (i, 0)),
                    pl.BlockSpec((V_pad, D), lambda i: (0, 0)),
                ],
                out_specs=pl.BlockSpec((tb, V_pad), lambda i: (i, 0)),
            ),
            compiler_params=pltpu.CompilerParams(
                dimension_semantics=("parallel",),
                vmem_limit_bytes=vmem_limit,
            ),
        )(x_emb, neigh)
    else:
        # Two-pass online softmax with streamed output blocks.
        # During the stats pass (ph == 0) the output block index stays (i, 0),
        # so nothing is flushed until it is written at (ph == 1, j == 0).
        # TODO(synk): if DMA is still exposed for very small D, sweep
        # pipeline_mode=pl.Buffered(3) on the neigh BlockSpec.
        out = pl.pallas_call(
            _make_two_pass_kernel(mask_tail, V),
            out_shape=jax.ShapeDtypeStruct((B_pad, V_pad), out_dtype),
            grid_spec=pltpu.PrefetchScalarGridSpec(
                num_scalar_prefetch=0,
                grid=(nb, 2, nv),
                in_specs=[
                    pl.BlockSpec((tb, D), lambda i, ph, j: (i, 0)),
                    pl.BlockSpec((tv, D), lambda i, ph, j: (j, 0)),
                ],
                out_specs=pl.BlockSpec((tb, tv), lambda i, ph, j: (i, j * ph)),
                scratch_shapes=[
                    pltpu.VMEM((tb, 1), jnp.float32),   # running max
                    pltpu.VMEM((tb, 1), jnp.float32),   # running sum -> 1/sum
                ],
            ),
            compiler_params=pltpu.CompilerParams(
                dimension_semantics=("parallel", "arbitrary", "arbitrary"),
                vmem_limit_bytes=vmem_limit,
            ),
        )(x_emb, neigh)

    return out[:B, :V]


def _ref_probs_bf16(xs, word_embs, neigh_bf16):
    """Reference matching the kernel's numerics (bf16 matmul inputs, f32 softmax)."""
    x_bf = jnp.take(word_embs, xs, axis=0).astype(jnp.bfloat16)
    logits = jax.lax.dot_general(
        x_bf, neigh_bf16.astype(jnp.bfloat16),
        dimension_numbers=(((1,), (1,)), ((), ())),
        preferred_element_type=jnp.float32)
    return jax.nn.softmax(logits, axis=1)


if __name__ == "__main__":
    # Small deterministic setup consistent with the module:
    #   vocab size V = 128, embedding size D = 32, batch B = 8
    V, D, B = 128, 32, 8

    key = jax.random.PRNGKey(0)
    k_w, k_n, k_x = jax.random.split(key, 3)

    # nn.Embedding default init: N(0, 1)
    word_embs = jax.random.normal(k_w, (V, D), dtype=jnp.float32)
    neigh_embs = jax.random.normal(k_n, (V, D), dtype=jnp.float32)
    # Keep the streamed table persistently bf16 (avoids a per-call cast).
    neigh_bf16 = neigh_embs.astype(jnp.bfloat16)
    x = jax.random.randint(k_x, (B,), 0, V, dtype=jnp.int32)

    y = jax.block_until_ready(jax.jit(skipgram_forward)(x, word_embs, neigh_bf16))
    assert y.shape == (B, V) and y.dtype == jnp.float32

    ref_bf = _ref_probs_bf16(x, word_embs, neigh_bf16)
    ref_f32 = jax.nn.softmax(jnp.take(word_embs, x, axis=0) @ neigh_embs.T, axis=1)
    assert jnp.allclose(jnp.sum(y, axis=1), 1.0, atol=1e-3), "rows do not sum to 1"
    assert jnp.allclose(y, ref_bf, atol=2e-2, rtol=2e-2), "mismatch vs bf16-matched reference"
    assert jnp.allclose(y, ref_f32, atol=1e-1, rtol=1e-1), "mismatch vs f32 reference"

    # Exercise the two-pass streamed-output path + masked vocab tail + nb > 1
    # at small shapes (V not a multiple of 128, vocab tile forced to 128).
    V2, B2 = 300, 24
    k_w2, k_n2, k_x2 = jax.random.split(jax.random.PRNGKey(1), 3)
    we2 = jax.random.normal(k_w2, (V2, D), dtype=jnp.float32)
    ne2 = jax.random.normal(k_n2, (V2, D), dtype=jnp.float32).astype(jnp.bfloat16)
    x2 = jax.random.randint(k_x2, (B2,), 0, V2, dtype=jnp.int32)
    fwd2 = jax.jit(functools.partial(skipgram_forward, max_vocab_tile=128))
    y2 = jax.block_until_ready(fwd2(x2, we2, ne2))
    ref2 = _ref_probs_bf16(x2, we2, ne2)
    assert y2.shape == (B2, V2)
    assert jnp.allclose(jnp.sum(y2, axis=1), 1.0, atol=1e-3)
    assert jnp.allclose(y2, ref2, atol=2e-2, rtol=2e-2)

    # Exercise the single-tile path with a masked (non-128-multiple) vocab.
    V3, B3 = 200, 4
    k_w3, k_n3, k_x3 = jax.random.split(jax.random.PRNGKey(2), 3)
    we3 = jax.random.normal(k_w3, (V3, D), dtype=jnp.float32)
    ne3 = jax.random.normal(k_n3, (V3, D), dtype=jnp.float32).astype(jnp.bfloat16)
    x3 = jax.random.randint(k_x3, (B3,), 0, V3, dtype=jnp.int32)
    y3 = jax.block_until_ready(jax.jit(skipgram_forward)(x3, we3, ne3))
    ref3 = _ref_probs_bf16(x3, we3, ne3)
    assert y3.shape == (B3, V3)
    assert jnp.allclose(jnp.sum(y3, axis=1), 1.0, atol=1e-3)
    assert jnp.allclose(y3, ref3, atol=2e-2, rtol=2e-2)

    print("KERNEL_OK")
</pallas_src>

<mosaic_0001>
module attributes {stable_mosaic.version = 11 : i64} {
  func.func @kernel(%arg0: i32, %arg1: memref<8x32xbf16, #tpu.memory_space<vmem>>, %arg2: memref<128x32xbf16, #tpu.memory_space<vmem>>, %arg3: memref<8x128xf32, #tpu.memory_space<vmem>>) attributes {dimension_semantics = [#tpu.dimension_semantics<parallel>], iteration_bounds = array<i64: 1>, scalar_prefetch = 0 : i64, scratch_operands = 0 : i64, tpu.core_type = #tpu.core_type<tc>, window_params = [{transform_indices = @transform_0, window_bounds = array<i64: 8, 32>}, {pipeline_mode = #tpu.pipeline_mode<synchronous>, transform_indices = @transform_1, window_bounds = array<i64: 128, 32>}, {transform_indices = @transform_2, window_bounds = array<i64: 8, 128>}]} {
    %c0 = arith.constant 0 : index
    %c0_0 = arith.constant 0 : index
    %0 = vector.load %arg1[%c0, %c0_0] : memref<8x32xbf16, #tpu.memory_space<vmem>>, vector<8x32xbf16>
    %c0_1 = arith.constant 0 : index
    %c0_2 = arith.constant 0 : index
    %1 = vector.load %arg2[%c0_1, %c0_2] : memref<128x32xbf16, #tpu.memory_space<vmem>>, vector<128x32xbf16>
    %cst = arith.constant dense<0.000000e+00> : vector<8x128xf32>
    %2 = tpu.matmul %0, %1, %cst {dimension_numbers = #tpu.dot_dimension_numbers<[1], [1], [0], [0], [0, 0, 1, 0], [], []>} : vector<8x32xbf16>, vector<128x32xbf16>, vector<8x128xf32> -> vector<8x128xf32>
    %cst_3 = arith.constant dense<0xFF800000> : vector<8xf32>
    %3 = vector.multi_reduction <maximumf>, %2, %cst_3 [1] : vector<8x128xf32> to vector<8xf32>
    %4 = vector.shape_cast %3 : vector<8xf32> to vector<8x1xf32>
    %5 = vector.broadcast %4 : vector<8x1xf32> to vector<8x128xf32>
    %6 = arith.subf %2, %5 : vector<8x128xf32>
    %7 = math.exp %6 : vector<8x128xf32>
    %cst_4 = arith.constant dense<0.000000e+00> : vector<8xf32>
    %8 = vector.multi_reduction <add>, %7, %cst_4 [1] : vector<8x128xf32> to vector<8xf32>
    %9 = vector.shape_cast %8 : vector<8xf32> to vector<8x1xf32>
    %cst_5 = arith.constant 1.000000e+00 : f32
    %10 = vector.broadcast %cst_5 : f32 to vector<8x1xf32>
    %11 = arith.divf %10, %9 : vector<8x1xf32>
    %12 = vector.broadcast %11 : vector<8x1xf32> to vector<8x128xf32>
    %13 = arith.mulf %7, %12 : vector<8x128xf32>
    %c0_6 = arith.constant 0 : index
    %c0_7 = arith.constant 0 : index
    %14 = vector.load %arg3[%c0_6, %c0_7] : memref<8x128xf32, #tpu.memory_space<vmem>>, vector<8x128xf32>
    tpu.vector_store %arg3[%c0_6, %c0_7], %13 {strides = array<i32>} : memref<8x128xf32, #tpu.memory_space<vmem>>, vector<8x128xf32>,
    return
  }
  func.func @transform_0(%arg0: i32) -> (i32, i32) {
    %c0_i32 = arith.constant 0 : i32
    %c0_i32_0 = arith.constant 0 : i32
    return %arg0, %c0_i32 : i32, i32
  }
  func.func @transform_1(%arg0: i32) -> (i32, i32) {
    %c0_i32 = arith.constant 0 : i32
    %c0_i32_0 = arith.constant 0 : i32
    %c0_i32_1 = arith.constant 0 : i32
    return %c0_i32, %c0_i32_0 : i32, i32
  }
  func.func @transform_2(%arg0: i32) -> (i32, i32) {
    %c0_i32 = arith.constant 0 : i32
    %c0_i32_0 = arith.constant 0 : i32
    return %arg0, %c0_i32 : i32, i32
  }
}

</mosaic_0001>

<llo_original>
// kernel: skipgram_forward.1
$region0: #{skipgram_forward.1}
  #allocation0 [shape = 'u32[]', space=smem, size = 0x4, offset = 0x4, fixed_abs, tag = 'smem constant byte address 0x4 - core index']
  #allocation1 [shape = 'u32[144,128]{1,0:T(1,128)}', space=vmem, size = 0x12000, scoped, tag = 'internal scratch']
  %s0 = inlined_call_operand.vmem [shape: bf16[8,32], index: 0, kind: input, shape index: {}]
  %s1 = inlined_call_operand.vmem [shape: bf16[128,32], index: 1, kind: input, shape index: {}]
  %s2 = inlined_call_operand.hbm [shape: f32[8,128], index: 2, kind: output, shape index: {}]
  %s3 = sld [smem:[#allocation0]]
  $region18: #{skipgram_forward.1} parent=0
    _
  %s5 = ssub.s32 1, %s3
  %s6 = scalar_select 0, %s5, %s3
  $region1: #{skipgram_forward.1} parent=0
    #allocation2 [shape = 'u8[4096]{0}', space=vmem, size = 0x1000, scoped, tag = 'output window, operand 0, single buffered']
    #allocation3 [shape = 's32[1]{0}', space=sflag, size = 0x4, scoped, tag = 'scoped memory for skipgram_forward.1']
    %7 = vsyncpa [#allocation3], 0
    // Predicated region
    $region2: #{skipgram_forward.1} parent=1 // pred_check
      _
    $region3: #{skipgram_forward.1} parent=1 // pred_check_branch
      %9 = sbr.rel (0) target = $region5
    $region4: #{skipgram_forward.1} parent=1 // pred_region
      _
    $region5: #{skipgram_forward.1} parent=1 // pred_fallthru
      _
    // Predicated region
    $region6: #{skipgram_forward.1} parent=1 // pred_check
      _
    $region7: #{skipgram_forward.1} parent=1 // pred_check_branch
      %11 = sbr.rel (0) target = $region9
    $region8: #{skipgram_forward.1} parent=1 // pred_region
      _
    $region9: #{skipgram_forward.1} parent=1 // pred_fallthru
      _
    %v13 = vld [vmem:[%s0] sm:$0xf]
    %v14 = vld [vmem:[%s1] sm:$0xf]
    %v15 = vld [vmem:[%s1 + $0x4] sm:$0xf]
    %v16 = vld [vmem:[%s1 + $0x8] sm:$0xf]
    %v17 = vld [vmem:[%s1 + $0xc] sm:$0xf]
    %v18 = vld [vmem:[%s1 + $0x10] sm:$0xf]
    %v19 = vld [vmem:[%s1 + $0x14] sm:$0xf]
    %v20 = vld [vmem:[%s1 + $0x18] sm:$0xf]
    %v21 = vld [vmem:[%s1 + $0x1c] sm:$0xf]
    %v22 = vld [vmem:[%s1 + $0x20] sm:$0xf]
    %v23 = vld [vmem:[%s1 + $0x24] sm:$0xf]
    %v24 = vld [vmem:[%s1 + $0x28] sm:$0xf]
    %v25 = vld [vmem:[%s1 + $0x2c] sm:$0xf]
    %v26 = vld [vmem:[%s1 + $0x30] sm:$0xf]
    %v27 = vld [vmem:[%s1 + $0x34] sm:$0xf]
    %v28 = vld [vmem:[%s1 + $0x38] sm:$0xf]
    %v29 = vld [vmem:[%s1 + $0x3c] sm:$0xf]
    %v46 = vunpack.c.l.b16 %v14
    %v47 = vunpack.c.l.b16 %v15
    %v48 = vunpack.c.l.b16 %v16
    %v49 = vunpack.c.l.b16 %v17
    %v50 = vunpack.c.l.b16 %v18
    %v51 = vunpack.c.l.b16 %v19
    %v52 = vunpack.c.l.b16 %v20
    %v53 = vunpack.c.l.b16 %v21
    %v54 = vunpack.c.l.b16 %v22
    %v55 = vunpack.c.l.b16 %v23
    %v56 = vunpack.c.l.b16 %v24
    %v57 = vunpack.c.l.b16 %v25
    %v58 = vunpack.c.l.b16 %v26
    %v59 = vunpack.c.l.b16 %v27
    %v60 = vunpack.c.l.b16 %v28
    %v61 = vunpack.c.l.b16 %v29
    %v62 = vpack.c.b16 %v47, %v46
    %v63 = vpack.c.b16 %v49, %v48
    %v64 = vpack.c.b16 %v51, %v50
    %v65 = vpack.c.b16 %v53, %v52
    %v66 = vpack.c.b16 %v55, %v54
    %v67 = vpack.c.b16 %v57, %v56
    %v68 = vpack.c.b16 %v59, %v58
    %v69 = vpack.c.b16 %v61, %v60
    %vm70 = vcmask 261120
    %v72 = vsel %vm70, %v13, 0
    %v75 = vsel %vm70, %v62, 0
    %v78 = vsel %vm70, %v63, 0
    %v81 = vsel %vm70, %v64, 0
    %v84 = vsel %vm70, %v65, 0
    %v87 = vsel %vm70, %v66, 0
    %v90 = vsel %vm70, %v67, 0
    %v93 = vsel %vm70, %v68, 0
    %v96 = vsel %vm70, %v69, 0
    %98 = vmatprep.subr.bf16.mxu0 0
    %99 = vmatpush1.bf16.xpose.msra.mxu0 %v75
    %100 = vmatprep.subr.bf16.mxu0 0
    %101 = vmatpush1.bf16.xpose.msra.mxu0 %v78
    %102 = vmatprep.subr.bf16.mxu0 0
    %103 = vmatpush1.bf16.xpose.msra.mxu0 %v81
    %104 = vmatprep.subr.bf16.mxu0 0
    %105 = vmatpush1.bf16.xpose.msra.mxu0 %v84
    %106 = vmatprep.subr.bf16.mxu0 0
    %107 = vmatpush1.bf16.xpose.msra.mxu0 %v87
    %108 = vmatprep.subr.bf16.mxu0 0
    %109 = vmatpush1.bf16.xpose.msra.mxu0 %v90
    %110 = vmatprep.subr.bf16.mxu0 0
    %111 = vmatpush1.bf16.xpose.msra.mxu0 %v93
    %112 = vmatprep.subr.bf16.mxu0 0
    %113 = vmatpush1.bf16.xpose.msra.mxu0 %v96
    %114 = vmatprep.subr.bf16.mxu0 0
    %115 = vmatpush1.bf16.xpose.msra.mxu0 0
    %116 = vmatprep.subr.bf16.mxu0 0
    %117 = vmatpush1.bf16.xpose.msra.mxu0 0
    %118 = vmatprep.subr.bf16.mxu0 0
    %119 = vmatpush1.bf16.xpose.msra.mxu0 0
    %120 = vmatprep.subr.bf16.mxu0 0
    %121 = vmatpush1.bf16.xpose.msra.mxu0 0
    %122 = vmatprep.subr.bf16.mxu0 0
    %123 = vmatpush1.bf16.xpose.msra.mxu0 0
    %124 = vmatprep.subr.bf16.mxu0 0
    %125 = vmatpush1.bf16.xpose.msra.mxu0 0
    %126 = vmatprep.subr.bf16.mxu0 0
    %127 = vmatpush1.bf16.xpose.msra.mxu0 0
    %128 = vmatprep.subr.bf16.mxu0 0
    %129 = vmatpush1.bf16.xpose.msra.mxu0 0
    %130 = vmatprep.mubr.bf16.mxu0 0
    %131 = vmatmul.mubr.bf16.gmra.mrb[0].mxu0 %v72
    %v132 = vpop.f32.mrb[0].mxu0
    %v133 = vadd.f32 0.0, %v132
    %v134 = vpop.f32.mrb[0].mxu0
    %v135 = vpop.f32.mrb[0].mxu0
    %v136 = vpop.f32.mrb[0].mxu0
    %137 = vdwg.mxu0
    %138 = vmax.xlane.f32.xlu0 %v133
    %v139 = vpop.xlane.xlu0 %138
    %v140 = vsub.f32 %v133, %v139
    %v141 = vmul.f32 %v140, 1.442695
    %v142 = vpow.pop %v141
    %143 = vadd.xlane.f32.xlu0 %v142
    %v144 = vpop.xlane.xlu0 %143
    %v145 = vrcp.pop %v144
    %v146 = vmul.f32 1.0, %v145
    %v147 = vmul.f32 %v142, %v146
    %148 = vst [vmem:[#allocation2] sm:$0xff] %v147
    // Predicated region
    $region10: #{skipgram_forward.1} parent=1 // pred_check
      _
    $region11: #{skipgram_forward.1} parent=1 // pred_check_branch
      %150 = sbr.rel (0) target = $region13
    $region12: #{skipgram_forward.1} parent=1 // pred_region
      %s152 = ssub.s32 128, 128
      %153 = vsyncadd [#allocation3], %s152
      %s155 = sshll.u32 [#allocation2], 4
      %s156 = int_to_ptr.vmem [resolvable:$true] %s155
      %158 = dma.vmem_to_hbm [thread:$0]  %s156, 128, %s2, [#allocation3]
    $region13: #{skipgram_forward.1} parent=1 // pred_fallthru
      _
    // Predicated region
    $region14: #{skipgram_forward.1} parent=1 // pred_check
      _
    $region15: #{skipgram_forward.1} parent=1 // pred_check_branch
      %160 = sbr.rel (0) target = $region17
    $region16: #{skipgram_forward.1} parent=1 // pred_region
      %161 = dma.done [#allocation3], 128
    $region17: #{skipgram_forward.1} parent=1 // pred_fallthru
      _
    %162 = vsyncpa [#allocation3], 1

</llo_original>
